<compile_context>
chip_gen: v6e
topology: v6e:2x2x1
jax: 0.10.0
libtpu: 0.0.40
codegen_flags: <defaults>
</compile_context>

<pallas_src>
import jax
import jax.numpy as jnp
from jax.experimental import pallas as pl
from jax.experimental.pallas import tpu as pltpu

EPS = 1e-5  # PyTorch BatchNorm2d default eps


def _make_conv_relu_stats_kernel(H, W, Cin):
    """Pass 1: fused conv(3x3, pad=1) + bias + ReLU + partial BN statistics."""
    WCin = W * Cin

    def kernel(x_ref, w_ref, b_ref, y_ref, stats_ref, xpad_ref, im2col_ref):
        # Zero-padding folded into the kernel: zero the padded scratch, then
        # overwrite the interior with this image. Border rows/cols stay zero.
        xpad_ref[...] = jnp.zeros_like(xpad_ref)
        xpad_ref[1:H + 1, Cin:Cin + WCin] = x_ref[...]

        # im2col into a VMEM scratch: nine shifted (H, W*Cin) windows laid out
        # along K -> a single K-dense MXU contraction instead of nine tiny ones.
        for kh in range(3):
            for kw in range(3):
                t = kh * 3 + kw
                im2col_ref[:, t * WCin:(t + 1) * WCin] = (
                    xpad_ref[kh:kh + H, kw * Cin:kw * Cin + WCin])

        # (H, 9*W*Cin) @ (9*W*Cin, W*Cout): output already lane-dense (H, W*Cout).
        acc = jnp.dot(im2col_ref[...], w_ref[...],
                      preferred_element_type=jnp.float32)
        y = jnp.maximum(acc + b_ref[...], 0.0)          # conv bias, then ReLU

        # Partial BatchNorm stats per (w, c) column; reduced to per-channel
        # sums in the wrapper (tiny).
        stats_ref[0:1, :] = jnp.sum(y, axis=0, keepdims=True)
        stats_ref[1:2, :] = jnp.sum(y * y, axis=0, keepdims=True)

        # Lane-dense store (last dim W*Cout, multiple of 128 at these shapes).
        y_ref[...] = y

    return kernel


def _bn_apply_kernel(y_ref, scale_ref, shift_ref, out_ref):
    """Pass 2: y * scale + shift with per-channel constants folded in."""
    out_ref[...] = y_ref[...] * scale_ref[...] + shift_ref[...]


def conv_block(x_nchw, weight_oihw, bias, gamma, beta):
    """ConvBlock forward. x_nchw: (N, Cin, H, W) f32 -> (N, Cout, H, W) f32."""
    n, cin, h, w = x_nchw.shape
    cout = weight_oihw.shape[0]
    wcin, wcout = w * cin, w * cout
    kdim = 9 * wcin

    # Layout glue: NCHW -> NHWC -> (N, H, W*Cin). The trailing reshape is free.
    x2 = jnp.transpose(x_nchw, (0, 2, 3, 1)).astype(jnp.float32).reshape(n, h, wcin)

    # Block-diagonal conv weights: for each tap, kron(I_W, w[kh,kw]) so that the
    # single matmul produces the (H, W*Cout) lane-dense output directly.
    w_hwio = jnp.transpose(weight_oihw, (2, 3, 1, 0)).astype(jnp.float32)  # (3,3,Cin,Cout)
    eye_w = jnp.eye(w, dtype=jnp.float32)
    w_big = jnp.concatenate(
        [jnp.kron(eye_w, w_hwio[kh, kw]) for kh in range(3) for kw in range(3)],
        axis=0)                                           # (9*W*Cin, W*Cout)
    bias_t = jnp.tile(bias.astype(jnp.float32), w)[None, :]   # (1, W*Cout)

    # ---------------- Pass 1: conv + bias + ReLU + partial stats ----------------
    grid_spec = pltpu.PrefetchScalarGridSpec(
        num_scalar_prefetch=0,
        grid=(n,),
        in_specs=[
            pl.BlockSpec((None, h, wcin), lambda i: (i, 0, 0)),
            pl.BlockSpec((kdim, wcout), lambda i: (0, 0)),
            pl.BlockSpec((1, wcout), lambda i: (0, 0)),
        ],
        out_specs=[
            pl.BlockSpec((None, h, wcout), lambda i: (i, 0, 0)),
            pl.BlockSpec((None, 2, wcout), lambda i: (i, 0, 0)),
        ],
        scratch_shapes=[
            pltpu.VMEM((h + 2, (w + 2) * cin), jnp.float32),  # zero-padded tile
            pltpu.VMEM((h, kdim), jnp.float32),               # im2col buffer
        ],
    )
    y_flat, stats = pl.pallas_call(
        _make_conv_relu_stats_kernel(h, w, cin),
        grid_spec=grid_spec,
        out_shape=(
            jax.ShapeDtypeStruct((n, h, wcout), jnp.float32),
            jax.ShapeDtypeStruct((n, 2, wcout), jnp.float32),
        ),
        compiler_params=pltpu.CompilerParams(
            dimension_semantics=("parallel",)),
    )(x2, w_big, bias_t)

    # ---------------- Fold batch statistics into per-channel scale/shift -------
    count = jnp.float32(n * h * w)
    stats4 = stats.reshape(n, 2, w, cout)
    s1 = jnp.sum(stats4[:, 0], axis=(0, 1))                  # (Cout,)
    s2 = jnp.sum(stats4[:, 1], axis=(0, 1))
    mean = s1 / count
    var = jnp.maximum(s2 / count - mean * mean, 0.0)         # biased variance
    scale = gamma.astype(jnp.float32) * jax.lax.rsqrt(var + EPS)
    shift = beta.astype(jnp.float32) - mean * scale
    scale_t = jnp.tile(scale, w)[None, :]                    # (1, W*Cout)
    shift_t = jnp.tile(shift, w)[None, :]

    # ---------------- Pass 2: lane-dense elementwise BN apply -------------------
    out_flat = pl.pallas_call(
        _bn_apply_kernel,
        grid=(n,),
        in_specs=[
            pl.BlockSpec((None, h, wcout), lambda i: (i, 0, 0)),
            pl.BlockSpec((1, wcout), lambda i: (0, 0)),
            pl.BlockSpec((1, wcout), lambda i: (0, 0)),
        ],
        out_specs=pl.BlockSpec((None, h, wcout), lambda i: (i, 0, 0)),
        out_shape=jax.ShapeDtypeStruct((n, h, wcout), jnp.float32),
        compiler_params=pltpu.CompilerParams(
            dimension_semantics=("parallel",)),
    )(y_flat, scale_t, shift_t)

    out_nhwc = out_flat.reshape(n, h, w, cout)               # free reshape
    return jnp.transpose(out_nhwc, (0, 3, 1, 2))             # back to NCHW


def reference(x_nchw, weight_oihw, bias, gamma, beta):
    """Pure-JAX reference matching the PyTorch module (training-mode BN)."""
    y = jax.lax.conv_general_dilated(
        x_nchw, weight_oihw, window_strides=(1, 1), padding="SAME",
        dimension_numbers=("NCHW", "OIHW", "NCHW"))
    y = y + bias[None, :, None, None]
    y = jnp.maximum(y, 0.0)
    mean = jnp.mean(y, axis=(0, 2, 3), keepdims=True)
    var = jnp.mean((y - mean) ** 2, axis=(0, 2, 3), keepdims=True)
    y = (y - mean) * jax.lax.rsqrt(var + EPS)
    return y * gamma[None, :, None, None] + beta[None, :, None, None]


if __name__ == "__main__":
    key = jax.random.PRNGKey(0)
    k_x, k_w, k_b, k_g, k_be = jax.random.split(key, 5)

    N, Cin, Cout, H, W = 2, 4, 8, 16, 16

    x = jax.random.normal(k_x, (N, Cin, H, W), dtype=jnp.float32)
    weight = jax.random.normal(k_w, (Cout, Cin, 3, 3), dtype=jnp.float32) * 0.1
    bias = jax.random.normal(k_b, (Cout,), dtype=jnp.float32) * 0.1
    gamma = 1.0 + 0.1 * jax.random.normal(k_g, (Cout,), dtype=jnp.float32)
    beta = 0.1 * jax.random.normal(k_be, (Cout,), dtype=jnp.float32)

    out = jax.block_until_ready(conv_block(x, weight, bias, gamma, beta))
    ref = jax.block_until_ready(reference(x, weight, bias, gamma, beta))

    assert out.shape == (N, Cout, H, W)
    assert jnp.allclose(out, ref, atol=1e-4, rtol=1e-4), \
        f"max abs err {jnp.max(jnp.abs(out - ref))}"

    print("KERNEL_OK")
</pallas_src>

<mosaic_0001>
module attributes {stable_mosaic.version = 11 : i64} {
  func.func @kernel(%arg0: i32, %arg1: memref<1x16x64xf32, #tpu.memory_space<vmem>>, %arg2: memref<576x128xf32, #tpu.memory_space<vmem>>, %arg3: memref<1x128xf32, #tpu.memory_space<vmem>>, %arg4: memref<1x16x128xf32, #tpu.memory_space<vmem>>, %arg5: memref<1x2x128xf32, #tpu.memory_space<vmem>>, %arg6: memref<18x72xf32, #tpu.memory_space<vmem>>, %arg7: memref<16x576xf32, #tpu.memory_space<vmem>>) attributes {dimension_semantics = [#tpu.dimension_semantics<parallel>], iteration_bounds = array<i64: 2>, scalar_prefetch = 0 : i64, scratch_operands = 2 : i64, tpu.core_type = #tpu.core_type<tc>, window_params = [{transform_indices = @transform_0, window_bounds = array<i64: 1, 16, 64>}, {pipeline_mode = #tpu.pipeline_mode<synchronous>, transform_indices = @transform_1, window_bounds = array<i64: 576, 128>}, {pipeline_mode = #tpu.pipeline_mode<synchronous>, transform_indices = @transform_2, window_bounds = array<i64: 1, 128>}, {transform_indices = @transform_3, window_bounds = array<i64: 1, 16, 128>}, {transform_indices = @transform_4, window_bounds = array<i64: 1, 2, 128>}]} {
    %cst = arith.constant 0.000000e+00 : f32
    %0 = vector.broadcast %cst : f32 to vector<18x72xf32>
    %c0 = arith.constant 0 : index
    %c0_0 = arith.constant 0 : index
    %1 = vector.load %arg6[%c0, %c0_0] : memref<18x72xf32, #tpu.memory_space<vmem>>, vector<18x72xf32>
    tpu.vector_store %arg6[%c0, %c0_0], %0 {strides = array<i32>} : memref<18x72xf32, #tpu.memory_space<vmem>>, vector<18x72xf32>,
    %c0_1 = arith.constant 0 : index
    %c0_2 = arith.constant 0 : index
    %c0_3 = arith.constant 0 : index
    %2 = vector.load %arg1[%c0_1, %c0_2, %c0_3] : memref<1x16x64xf32, #tpu.memory_space<vmem>>, vector<1x16x64xf32>
    %3 = vector.shape_cast %2 : vector<1x16x64xf32> to vector<16x64xf32>
    %c1 = arith.constant 1 : index
    %c4 = arith.constant 4 : index
    %4 = vector.load %arg6[%c1, %c4] : memref<18x72xf32, #tpu.memory_space<vmem>>, vector<16x64xf32>
    tpu.vector_store %arg6[%c1, %c4], %3 {strides = array<i32>} : memref<18x72xf32, #tpu.memory_space<vmem>>, vector<16x64xf32>,
    %c0_4 = arith.constant 0 : index
    %c0_5 = arith.constant 0 : index
    %5 = vector.load %arg6[%c0_4, %c0_5] : memref<18x72xf32, #tpu.memory_space<vmem>>, vector<16x64xf32>
    %c0_6 = arith.constant 0 : index
    %c0_7 = arith.constant 0 : index
    %6 = vector.load %arg7[%c0_6, %c0_7] : memref<16x576xf32, #tpu.memory_space<vmem>>, vector<16x64xf32>
    tpu.vector_store %arg7[%c0_6, %c0_7], %5 {strides = array<i32>} : memref<16x576xf32, #tpu.memory_space<vmem>>, vector<16x64xf32>,
    %c0_8 = arith.constant 0 : index
    %c4_9 = arith.constant 4 : index
    %7 = vector.load %arg6[%c0_8, %c4_9] : memref<18x72xf32, #tpu.memory_space<vmem>>, vector<16x64xf32>
    %c0_10 = arith.constant 0 : index
    %c64 = arith.constant 64 : index
    %8 = vector.load %arg7[%c0_10, %c64] : memref<16x576xf32, #tpu.memory_space<vmem>>, vector<16x64xf32>
    tpu.vector_store %arg7[%c0_10, %c64], %7 {strides = array<i32>} : memref<16x576xf32, #tpu.memory_space<vmem>>, vector<16x64xf32>,
    %c0_11 = arith.constant 0 : index
    %c8 = arith.constant 8 : index
    %9 = vector.load %arg6[%c0_11, %c8] : memref<18x72xf32, #tpu.memory_space<vmem>>, vector<16x64xf32>
    %c0_12 = arith.constant 0 : index
    %c128 = arith.constant 128 : index
    %10 = vector.load %arg7[%c0_12, %c128] : memref<16x576xf32, #tpu.memory_space<vmem>>, vector<16x64xf32>
    tpu.vector_store %arg7[%c0_12, %c128], %9 {strides = array<i32>} : memref<16x576xf32, #tpu.memory_space<vmem>>, vector<16x64xf32>,
    %c1_13 = arith.constant 1 : index
    %c0_14 = arith.constant 0 : index
    %11 = vector.load %arg6[%c1_13, %c0_14] : memref<18x72xf32, #tpu.memory_space<vmem>>, vector<16x64xf32>
    %c0_15 = arith.constant 0 : index
    %c192 = arith.constant 192 : index
    %12 = vector.load %arg7[%c0_15, %c192] : memref<16x576xf32, #tpu.memory_space<vmem>>, vector<16x64xf32>
    tpu.vector_store %arg7[%c0_15, %c192], %11 {strides = array<i32>} : memref<16x576xf32, #tpu.memory_space<vmem>>, vector<16x64xf32>,
    %c1_16 = arith.constant 1 : index
    %c4_17 = arith.constant 4 : index
    %13 = vector.load %arg6[%c1_16, %c4_17] : memref<18x72xf32, #tpu.memory_space<vmem>>, vector<16x64xf32>
    %c0_18 = arith.constant 0 : index
    %c256 = arith.constant 256 : index
    %14 = vector.load %arg7[%c0_18, %c256] : memref<16x576xf32, #tpu.memory_space<vmem>>, vector<16x64xf32>
    tpu.vector_store %arg7[%c0_18, %c256], %13 {strides = array<i32>} : memref<16x576xf32, #tpu.memory_space<vmem>>, vector<16x64xf32>,
    %c1_19 = arith.constant 1 : index
    %c8_20 = arith.constant 8 : index
    %15 = vector.load %arg6[%c1_19, %c8_20] : memref<18x72xf32, #tpu.memory_space<vmem>>, vector<16x64xf32>
    %c0_21 = arith.constant 0 : index
    %c320 = arith.constant 320 : index
    %16 = vector.load %arg7[%c0_21, %c320] : memref<16x576xf32, #tpu.memory_space<vmem>>, vector<16x64xf32>
    tpu.vector_store %arg7[%c0_21, %c320], %15 {strides = array<i32>} : memref<16x576xf32, #tpu.memory_space<vmem>>, vector<16x64xf32>,
    %c2 = arith.constant 2 : index
    %c0_22 = arith.constant 0 : index
    %17 = vector.load %arg6[%c2, %c0_22] : memref<18x72xf32, #tpu.memory_space<vmem>>, vector<16x64xf32>
    %c0_23 = arith.constant 0 : index
    %c384 = arith.constant 384 : index
    %18 = vector.load %arg7[%c0_23, %c384] : memref<16x576xf32, #tpu.memory_space<vmem>>, vector<16x64xf32>
    tpu.vector_store %arg7[%c0_23, %c384], %17 {strides = array<i32>} : memref<16x576xf32, #tpu.memory_space<vmem>>, vector<16x64xf32>,
    %c2_24 = arith.constant 2 : index
    %c4_25 = arith.constant 4 : index
    %19 = vector.load %arg6[%c2_24, %c4_25] : memref<18x72xf32, #tpu.memory_space<vmem>>, vector<16x64xf32>
    %c0_26 = arith.constant 0 : index
    %c448 = arith.constant 448 : index
    %20 = vector.load %arg7[%c0_26, %c448] : memref<16x576xf32, #tpu.memory_space<vmem>>, vector<16x64xf32>
    tpu.vector_store %arg7[%c0_26, %c448], %19 {strides = array<i32>} : memref<16x576xf32, #tpu.memory_space<vmem>>, vector<16x64xf32>,
    %c2_27 = arith.constant 2 : index
    %c8_28 = arith.constant 8 : index
    %21 = vector.load %arg6[%c2_27, %c8_28] : memref<18x72xf32, #tpu.memory_space<vmem>>, vector<16x64xf32>
    %c0_29 = arith.constant 0 : index
    %c512 = arith.constant 512 : index
    %22 = vector.load %arg7[%c0_29, %c512] : memref<16x576xf32, #tpu.memory_space<vmem>>, vector<16x64xf32>
    tpu.vector_store %arg7[%c0_29, %c512], %21 {strides = array<i32>} : memref<16x576xf32, #tpu.memory_space<vmem>>, vector<16x64xf32>,
    %c0_30 = arith.constant 0 : index
    %c0_31 = arith.constant 0 : index
    %23 = vector.load %arg7[%c0_30, %c0_31] : memref<16x576xf32, #tpu.memory_space<vmem>>, vector<16x576xf32>
    %c0_32 = arith.constant 0 : index
    %c0_33 = arith.constant 0 : index
    %24 = vector.load %arg2[%c0_32, %c0_33] : memref<576x128xf32, #tpu.memory_space<vmem>>, vector<576x128xf32>
    %cst_34 = arith.constant dense<0.000000e+00> : vector<16x128xf32>
    %25 = tpu.matmul %23, %24, %cst_34 {dimension_numbers = #tpu.dot_dimension_numbers<[1], [0], [0], [1], [0, 0, 1, 1], [], []>} : vector<16x576xf32>, vector<576x128xf32>, vector<16x128xf32> -> vector<16x128xf32>
    %c0_35 = arith.constant 0 : index
    %c0_36 = arith.constant 0 : index
    %26 = vector.load %arg3[%c0_35, %c0_36] : memref<1x128xf32, #tpu.memory_space<vmem>>, vector<1x128xf32>
    %27 = vector.broadcast %26 : vector<1x128xf32> to vector<16x128xf32>
    %28 = arith.addf %25, %27 : vector<16x128xf32>
    %cst_37 = arith.constant 0.000000e+00 : f32
    %29 = vector.broadcast %cst_37 : f32 to vector<16x128xf32>
    %30 = arith.maximumf %28, %29 : vector<16x128xf32>
    %cst_38 = arith.constant dense<0.000000e+00> : vector<128xf32>
    %31 = vector.multi_reduction <add>, %30, %cst_38 [0] : vector<16x128xf32> to vector<128xf32>
    %32 = vector.shape_cast %31 : vector<128xf32> to vector<1x128xf32>
    %c0_39 = arith.constant 0 : index
    %c0_40 = arith.constant 0 : index
    %c0_41 = arith.constant 0 : index
    %33 = vector.load %arg5[%c0_39, %c0_40, %c0_41] : memref<1x2x128xf32, #tpu.memory_space<vmem>>, vector<1x1x128xf32>
    %34 = vector.shape_cast %33 : vector<1x1x128xf32> to vector<1x128xf32>
    %35 = vector.shape_cast %32 : vector<1x128xf32> to vector<1x1x128xf32>
    tpu.vector_store %arg5[%c0_39, %c0_40, %c0_41], %35 {strides = array<i32>} : memref<1x2x128xf32, #tpu.memory_space<vmem>>, vector<1x1x128xf32>,
    %36 = arith.mulf %30, %30 : vector<16x128xf32>
    %cst_42 = arith.constant dense<0.000000e+00> : vector<128xf32>
    %37 = vector.multi_reduction <add>, %36, %cst_42 [0] : vector<16x128xf32> to vector<128xf32>
    %38 = vector.shape_cast %37 : vector<128xf32> to vector<1x128xf32>
    %c0_43 = arith.constant 0 : index
    %c1_44 = arith.constant 1 : index
    %c0_45 = arith.constant 0 : index
    %39 = vector.load %arg5[%c0_43, %c1_44, %c0_45] : memref<1x2x128xf32, #tpu.memory_space<vmem>>, vector<1x1x128xf32>
    %40 = vector.shape_cast %39 : vector<1x1x128xf32> to vector<1x128xf32>
    %41 = vector.shape_cast %38 : vector<1x128xf32> to vector<1x1x128xf32>
    tpu.vector_store %arg5[%c0_43, %c1_44, %c0_45], %41 {strides = array<i32>} : memref<1x2x128xf32, #tpu.memory_space<vmem>>, vector<1x1x128xf32>,
    %c0_46 = arith.constant 0 : index
    %c0_47 = arith.constant 0 : index
    %c0_48 = arith.constant 0 : index
    %42 = vector.load %arg4[%c0_46, %c0_47, %c0_48] : memref<1x16x128xf32, #tpu.memory_space<vmem>>, vector<1x16x128xf32>
    %43 = vector.shape_cast %42 : vector<1x16x128xf32> to vector<16x128xf32>
    %44 = vector.shape_cast %30 : vector<16x128xf32> to vector<1x16x128xf32>
    tpu.vector_store %arg4[%c0_46, %c0_47, %c0_48], %44 {strides = array<i32>} : memref<1x16x128xf32, #tpu.memory_space<vmem>>, vector<1x16x128xf32>,
    return
  }
  func.func @transform_0(%arg0: i32) -> (i32, i32, i32) {
    %c0_i32 = arith.constant 0 : i32
    %c0_i32_0 = arith.constant 0 : i32
    %c0_i32_1 = arith.constant 0 : i32
    return %arg0, %c0_i32, %c0_i32_0 : i32, i32, i32
  }
  func.func @transform_1(%arg0: i32) -> (i32, i32) {
    %c0_i32 = arith.constant 0 : i32
    %c0_i32_0 = arith.constant 0 : i32
    %c0_i32_1 = arith.constant 0 : i32
    return %c0_i32, %c0_i32_0 : i32, i32
  }
  func.func @transform_2(%arg0: i32) -> (i32, i32) {
    %c0_i32 = arith.constant 0 : i32
    %c0_i32_0 = arith.constant 0 : i32
    %c0_i32_1 = arith.constant 0 : i32
    return %c0_i32, %c0_i32_0 : i32, i32
  }
  func.func @transform_3(%arg0: i32) -> (i32, i32, i32) {
    %c0_i32 = arith.constant 0 : i32
    %c0_i32_0 = arith.constant 0 : i32
    %c0_i32_1 = arith.constant 0 : i32
    return %arg0, %c0_i32, %c0_i32_0 : i32, i32, i32
  }
  func.func @transform_4(%arg0: i32) -> (i32, i32, i32) {
    %c0_i32 = arith.constant 0 : i32
    %c0_i32_0 = arith.constant 0 : i32
    %c0_i32_1 = arith.constant 0 : i32
    return %arg0, %c0_i32, %c0_i32_0 : i32, i32, i32
  }
}

</mosaic_0001>

<llo_original>
// kernel: tpu_custom_call.1
$region0: #{tpu_custom_call.1}
  #allocation0 [shape = 'u32[]', space=smem, size = 0x4, offset = 0x4, fixed_abs, tag = 'smem constant byte address 0x4 - core index']
  #allocation1 [shape = 'u32[144,128]{1,0:T(1,128)}', space=vmem, size = 0x12000, scoped, tag = 'internal scratch']
  #allocation2 [shape = 'f32[18,72]{1,0:T(8,128)}', space=vmem, size = 0x3000, scoped, tag = 'scratch operand']
  #allocation3 [shape = 'f32[16,576]{1,0:T(8,128)}', space=vmem, size = 0xa000, scoped, tag = 'scratch operand']
  %s0 = inlined_call_operand.hbm [shape: f32[2,16,64], index: 0, kind: input, shape index: {}]
  %s1 = inlined_call_operand.hbm [shape: f32[576,128], index: 1, kind: input, shape index: {}]
  %s2 = inlined_call_operand.vmem [shape: f32[1,128], index: 2, kind: input, shape index: {}]
  %s3 = inlined_call_operand.hbm [shape: f32[2,16,128], index: 3, kind: output, shape index: {0}]
  %s4 = inlined_call_operand.hbm [shape: f32[2,2,128], index: 4, kind: output, shape index: {1}]
  %5 = xla_tuple %s3, %s4
  %s6 = sld [smem:[#allocation0]]
  $region61: #{tpu_custom_call.1} parent=0
    _
  %s8 = ssub.s32 1, %s6
  %s9 = scalar_select 0, %s8, %s6
  $region1: #{tpu_custom_call.1} parent=0
    #allocation4 [shape = 'u8[16384]{0}', space=vmem, size = 0x4000, scoped, tag = 'input window, operand 0']
    #allocation5 [shape = 's32[2]{0}', space=sflag, size = 0x8, scoped, tag = 'scoped memory for tpu_custom_call.1']
    #allocation6 [shape = 's32[2]{0}', space=sflag, size = 0x8, scoped, tag = 'scoped memory for tpu_custom_call.1']
    #allocation7 [shape = 'u8[294912]{0}', space=vmem, size = 0x48000, scoped, tag = 'input window, operand 1, single buffered']
    #allocation8 [shape = 's32[1]{0}', space=sflag, size = 0x4, scoped, tag = 'scoped memory for tpu_custom_call.1']
    #allocation9 [shape = 'u8[16384]{0}', space=vmem, size = 0x4000, scoped, tag = 'output window, operand 0']
    #allocation10 [shape = 'u8[2048]{0}', space=vmem, size = 0x800, scoped, tag = 'output window, operand 1']
    #allocation11 [shape = 's32[2]{0}', space=sflag, size = 0x8, scoped, tag = 'scoped memory for tpu_custom_call.1']
    %10 = vsyncpa [#allocation5], 0
    %s11 = scalar_lea.sflag [#allocation5], 1
    %12 = vsyncpa %s11, 0
    %13 = vsyncpa [#allocation8], 0
    %14 = vsyncpa [#allocation6], 0
    %s15 = scalar_lea.sflag [#allocation6], 1
    %16 = vsyncpa %s15, 0
    %17 = vsyncpa [#allocation11], 0
    %s18 = scalar_lea.sflag [#allocation11], 1
    %19 = vsyncpa %s18, 0
    loop: start=0, step=1, limit=4
    $region2: #{tpu_custom_call.1} parent=1 // loop_pre_header
      _
    $region3: #{tpu_custom_call.1} parent=1 // loop_header
      %s21 = sphi 0, %s25
      %p22 = scmp.ge.s32.totalorder %s21, 4
      %s31 = sphi 0, %s33
      %s34 = sphi 0, %s31
      %s35 = sphi 0, %s34
      %s51 = sphi 0, %s35
      %s55 = sphi 0, %s55
      %s57 = sphi 0, %s55
      %s58 = sphi 0, %s57
      %s72 = sphi 0, %s58
      %s76 = sphi 0, %s76
      %s78 = sphi 0, %s76
      %s79 = sphi 0, %s78
      %s93 = sphi 0, %s79
      %s99 = sphi 0, %s101
      %s102 = sphi 0, %s99
      %s103 = sphi 0, %s102
      %s119 = sphi 0, %s103
      %s125 = sphi 0, %s127
      %s128 = sphi 0, %s125
      %s129 = sphi 0, %s128
      %s145 = sphi 0, %s129
    $region4: #{tpu_custom_call.1} parent=1 // loop_header_branch
      %24 = sbr.rel (%p22) target = $region8
    $region5: #{tpu_custom_call.1} parent=1 // loop_body
      %s26 = ssub.s32 %s21, 1
      %s27 = ssub.s32 %s21, 2
      %s28 = sadd.s32 %s21, 1
      %s29 = ssub.s32 %s21, %s28
      %p30 = scmp.eq.s32.totalorder %s29, 0
      %s32 = sadd.s32 %s31, 1
      %s33 = scalar_select %p30, %s31, %s32
      %p36 = pneg %p30
      %p37 = scmp.eq.s32.totalorder %s21, 1
      %p38 = por %p36, %p37
      %p39 = scmp.ne.s32.totalorder %s31, %s34
      %p40 = scmp.eq.s32.totalorder %s21, 0
      %p41 = por %p39, %p40
      %p42 = scmp.ne.s32.totalorder %s31, %s34
      %p43 = scmp.eq.s32.totalorder %s26, 1
      %p44 = por %p42, %p43
      %p45 = scmp.ne.s32.totalorder %s34, %s35
      %p46 = scmp.eq.s32.totalorder %s26, 0
      %p47 = por %p45, %p46
      %p48 = scmp.ne.s32.totalorder %s34, %s35
      %p49 = scmp.eq.s32.totalorder %s27, 1
      %p50 = por %p48, %p49
      %p52 = scmp.ne.s32.totalorder %s35, %s51
      %p53 = scmp.eq.s32.totalorder %s27, 0
      %p54 = por %p52, %p53
      %s56 = sadd.s32 %s55, 1
      %p59 = scmp.eq.s32.totalorder %s21, 1
      %p60 = scmp.ne.s32.totalorder %s55, %s57
      %p61 = scmp.eq.s32.totalorder %s21, 0
      %p62 = por %p60, %p61
      %p63 = scmp.ne.s32.totalorder %s55, %s57
      %p64 = scmp.eq.s32.totalorder %s26, 1
      %p65 = por %p63, %p64
      %p66 = scmp.ne.s32.totalorder %s57, %s58
      %p67 = scmp.eq.s32.totalorder %s26, 0
      %p68 = por %p66, %p67
      %p69 = scmp.ne.s32.totalorder %s57, %s58
      %p70 = scmp.eq.s32.totalorder %s27, 1
      %p71 = por %p69, %p70
      %p73 = scmp.ne.s32.totalorder %s58, %s72
      %p74 = scmp.eq.s32.totalorder %s27, 0
      %p75 = por %p73, %p74
      %s77 = sadd.s32 %s76, 1
      %p80 = scmp.eq.s32.totalorder %s21, 1
      %p81 = scmp.ne.s32.totalorder %s76, %s78
      %p82 = scmp.eq.s32.totalorder %s21, 0
      %p83 = por %p81, %p82
      %p84 = scmp.ne.s32.totalorder %s76, %s78
      %p85 = scmp.eq.s32.totalorder %s26, 1
      %p86 = por %p84, %p85
      %p87 = scmp.ne.s32.totalorder %s78, %s79
      %p88 = scmp.eq.s32.totalorder %s26, 0
      %p89 = por %p87, %p88
      %p90 = scmp.ne.s32.totalorder %s78, %s79
      %p91 = scmp.eq.s32.totalorder %s27, 1
      %p92 = por %p90, %p91
      %p94 = scmp.ne.s32.totalorder %s79, %s93
      %p95 = scmp.eq.s32.totalorder %s27, 0
      %p96 = por %p94, %p95
      %s97 = ssub.s32 %s21, %s28
      %p98 = scmp.eq.s32.totalorder %s97, 0
      %s100 = sadd.s32 %s99, 1
      %s101 = scalar_select %p98, %s99, %s100
      %p104 = pneg %p98
      %p105 = scmp.eq.s32.totalorder %s21, 1
      %p106 = por %p104, %p105
      %p107 = scmp.ne.s32.totalorder %s99, %s102
      %p108 = scmp.eq.s32.totalorder %s21, 0
      %p109 = por %p107, %p108
      %p110 = scmp.ne.s32.totalorder %s99, %s102
      %p111 = scmp.eq.s32.totalorder %s26, 1
      %p112 = por %p110, %p111
      %p113 = scmp.ne.s32.totalorder %s102, %s103
      %p114 = scmp.eq.s32.totalorder %s26, 0
      %p115 = por %p113, %p114
      %p116 = scmp.ne.s32.totalorder %s102, %s103
      %p117 = scmp.eq.s32.totalorder %s27, 1
      %p118 = por %p116, %p117
      %p120 = scmp.ne.s32.totalorder %s103, %s119
      %p121 = scmp.eq.s32.totalorder %s27, 0
      %p122 = por %p120, %p121
      %s123 = ssub.s32 %s21, %s28
      %p124 = scmp.eq.s32.totalorder %s123, 0
      %s126 = sadd.s32 %s125, 1
      %s127 = scalar_select %p124, %s125, %s126
      %p130 = pneg %p124
      %p131 = scmp.eq.s32.totalorder %s21, 1
      %p132 = por %p130, %p131
      %p133 = scmp.ne.s32.totalorder %s125, %s128
      %p134 = scmp.eq.s32.totalorder %s21, 0
      %p135 = por %p133, %p134
      %p136 = scmp.ne.s32.totalorder %s125, %s128
      %p137 = scmp.eq.s32.totalorder %s26, 1
      %p138 = por %p136, %p137
      %p139 = scmp.ne.s32.totalorder %s128, %s129
      %p140 = scmp.eq.s32.totalorder %s26, 0
      %p141 = por %p139, %p140
      %p142 = scmp.ne.s32.totalorder %s128, %s129
      %p143 = scmp.eq.s32.totalorder %s27, 1
      %p144 = por %p142, %p143
      %p146 = scmp.ne.s32.totalorder %s129, %s145
      %p147 = scmp.eq.s32.totalorder %s27, 0
      %p148 = por %p146, %p147
      %p149 = scmp.le.s32.totalorder 1, %s21
      %p150 = scmp.lt.s32.totalorder %s21, 3
      %p151 = pnand %p149, %p150
      %p152 = pneg %p151
      // Predicated region
      $region9: #{tpu_custom_call.1} parent=5 // pred_check
        _
      $region10: #{tpu_custom_call.1} parent=5 // pred_check_branch
        %154 = sbr.rel (%p151) target = $region12
      $region11: #{tpu_custom_call.1} parent=5 // pred_region
        %s155 = ssub.s32 %s21, 1
        // Predicated region
        $region13: #{tpu_custom_call.1} parent=11 // pred_check
          %p156 = pneg %p68
        $region14: #{tpu_custom_call.1} parent=11 // pred_check_branch
          %158 = sbr.rel (%p156) target = $region16
        $region15: #{tpu_custom_call.1} parent=11 // pred_region
          %s160 = ssub.s32 9216, 9216
          %161 = vsyncadd [#allocation8], %s160
          %s162 = sshll.u32 [#allocation7], 4
          %s163 = int_to_ptr.vmem [resolvable:$true] %s162
          %168 = dma.hbm_to_vmem [thread:$0]  %s1, 9216, %s163, [#allocation8], 128, 128, 8
        $region16: #{tpu_custom_call.1} parent=11 // pred_fallthru
          _
        // Predicated region
        $region17: #{tpu_custom_call.1} parent=11 // pred_check
          %p169 = pneg %p89
        $region18: #{tpu_custom_call.1} parent=11 // pred_check_branch
          %171 = sbr.rel (%p169) target = $region20
        $region19: #{tpu_custom_call.1} parent=11 // pred_region
          _
        $region20: #{tpu_custom_call.1} parent=11 // pred_fallthru
          _
      $region12: #{tpu_custom_call.1} parent=5 // pred_fallthru
        _
      %p172 = scmp.lt.s32.totalorder %s21, 2
      // Predicated region
      $region21: #{tpu_custom_call.1} parent=5 // pred_check
        %p173 = pneg %p172
      $region22: #{tpu_custom_call.1} parent=5 // pred_check_branch
        %175 = sbr.rel (%p173) target = $region24
      $region23: #{tpu_custom_call.1} parent=5 // pred_region
        // Predicated region
        $region25: #{tpu_custom_call.1} parent=23 // pred_check
          %p176 = pneg %p41
        $region26: #{tpu_custom_call.1} parent=23 // pred_check_branch
          %178 = sbr.rel (%p176) target = $region28
        $region27: #{tpu_custom_call.1} parent=23 // pred_region
          %s179 = sand.u32 %s31, 1
          %s180 = scalar_lea.sflag [#allocation5], %s179
          %s181 = sand.u32 %s31, 1
          %s182 = smul.addr %s181, 16
          %s183 = scalar_lea.vmem [#allocation4], %s182
          %s185 = ssub.s32 256, 256
          %186 = vsyncadd %s180, %s185
          %s187 = smul.addr %s21, 2
          %s188 = smul.addr %s187, 128
          %s189 = scalar_lea.hbm %s0, %s188
          %s190 = sshll.u32 %s183, 4
          %s191 = int_to_ptr.vmem [resolvable:$true] %s190
          %196 = dma.hbm_to_vmem [thread:$0]  %s189, 256, %s191, %s180, 128, 128, 8
        $region28: #{tpu_custom_call.1} parent=23 // pred_fallthru
          _
      $region24: #{tpu_custom_call.1} parent=5 // pred_fallthru
        _
      %p197 = scmp.le.s32.totalorder 1, %s21
      %p198 = scmp.lt.s32.totalorder %s21, 3
      %p199 = pnand %p197, %p198
      %p200 = pneg %p199
      // Predicated region
      $region29: #{tpu_custom_call.1} parent=5 // pred_check
        _
      $region30: #{tpu_custom_call.1} parent=5 // pred_check_branch
        %202 = sbr.rel (%p199) target = $region32
      $region31: #{tpu_custom_call.1} parent=5 // pred_region
        %s203 = ssub.s32 %s21, 1
        %s204 = sand.u32 %s34, 1
        %s205 = scalar_lea.sflag [#allocation5], %s204
        %s206 = sand.u32 %s34, 1
        %s207 = smul.addr %s206, 16
        %s208 = scalar_lea.vmem [#allocation4], %s207
        // Predicated region
        $region33: #{tpu_custom_call.1} parent=31 // pred_check
          %p209 = pneg %p47
        $region34: #{tpu_custom_call.1} parent=31 // pred_check_branch
          %211 = sbr.rel (%p209) target = $region36
        $region35: #{tpu_custom_call.1} parent=31 // pred_region
          %212 = dma.done %s205, 256
        $region36: #{tpu_custom_call.1} parent=31 // pred_fallthru
          _
        // Predicated region
        $region37: #{tpu_custom_call.1} parent=31 // pred_check
          %p213 = pneg %p68
        $region38: #{tpu_custom_call.1} parent=31 // pred_check_branch
          %215 = sbr.rel (%p213) target = $region40
        $region39: #{tpu_custom_call.1} parent=31 // pred_region
          %216 = dma.done [#allocation8], 9216
        $region40: #{tpu_custom_call.1} parent=31 // pred_fallthru
          _
        %s217 = sand.u32 %s34, 1
        %s218 = scalar_lea.sflag [#allocation5], %s217
        %s219 = sand.u32 %s34, 1
        %s220 = smul.addr %s219, 16
        %s221 = scalar_lea.vmem [#allocation4], %s220
        %p222 = pneg %p47
        %p223 = pneg %p44
        %p224 = pneg %p68
        %p225 = pneg %p65
        %p226 = pneg %p89
        %p227 = pneg %p86
        %p228 = pneg %p115
        %p229 = pneg %p112
        %s230 = sand.u32 %s102, 1
        %s231 = scalar_lea.sflag [#allocation6], %s230
        %s232 = sand.u32 %s102, 1
        %s233 = smul.addr %s232, 16
        %s234 = scalar_lea.vmem [#allocation9], %s233
        %p235 = pneg %p141
        %p236 = pneg %p138
        %s237 = sand.u32 %s128, 1
        %s238 = scalar_lea.sflag [#allocation11], %s237
        %s239 = sand.u32 %s128, 1
        %s240 = smul.addr %s239, 2
        %s241 = scalar_lea.vmem [#allocation10], %s240
        %vm242 = vcmask 588800
        %243 = vst.msk [vmem:[#allocation2] sm:$0xff] %vm242, 0.0
        %244 = vst.msk [vmem:[#allocation2 + $0x8] sm:$0xff] %vm242, 0.0
        %vm245 = vcmask 582656
        %246 = vst.msk [vmem:[#allocation2 + $0x10] sm:$0x3] %vm245, 0.0
        %v247 = vld [vmem:[%s208] sm:$0xff]
        %v248 = vld [vmem:[%s208 + $0x8] sm:$0xff]
        %251 = vrot.lane.b32.xlu0 %v247, 4
        %v252 = vpop.permute.xlu0 %251
        %253 = vrot.lane.b32.xlu0 %v248, 4
        %v254 = vpop.permute.xlu0 %253
        %vm257 = vcmask 556064
        %258 = vst.msk [vmem:[#allocation2 + $0x1] sm:$0xff] %vm257, %v252
        %259 = vst.msk [vmem:[#allocation2 + $0x9] sm:$0xff] %vm257, %v254
        %v260 = vld [vmem:[#allocation2] sm:$0xff]
        %v261 = vld [vmem:[#allocation2 + $0x8] sm:$0xff]
        %vm262 = vcmask 523264
        %263 = vst.msk [vmem:[#allocation3] sm:$0xff] %vm262, %v260
        %264 = vst.msk [vmem:[#allocation3 + $0x28] sm:$0xff] %vm262, %v261
        %v265 = vld [vmem:[#allocation2] sm:$0xff]
        %v266 = vld [vmem:[#allocation2 + $0x8] sm:$0xff]
        %269 = vrot.lane.b32.xlu0 %v265, 60
        %v270 = vpop.permute.xlu0 %269
        %271 = vrot.lane.b32.xlu0 %v266, 60
        %v272 = vpop.permute.xlu0 %271
        %vm275 = vcmask 1048064
        %276 = vst.msk [vmem:[#allocation3] sm:$0xff] %vm275, %v270
        %277 = vst.msk [vmem:[#allocation3 + $0x28] sm:$0xff] %vm275, %v272
        %v278 = vld [vmem:[#allocation2] sm:$0xff]
        %v279 = vld [vmem:[#allocation2 + $0x8] sm:$0xff]
        %282 = vrot.lane.b32.xlu0 %v278, 120
        %v283 = vpop.permute.xlu0 %282
        %284 = vrot.lane.b32.xlu0 %v279, 120
        %v285 = vpop.permute.xlu0 %284
        %288 = vst.msk [vmem:[#allocation3 + $0x8] sm:$0xff] %vm262, %v283
        %289 = vst.msk [vmem:[#allocation3 + $0x30] sm:$0xff] %vm262, %v285
        %v290 = vld [vmem:[#allocation2 + $0x1] sm:$0xff]
        %v291 = vld [vmem:[#allocation2 + $0x9] sm:$0xff]
        %294 = vrot.lane.b32.xlu0 %v290, 64
        %v295 = vpop.permute.xlu0 %294
        %296 = vrot.lane.b32.xlu0 %v291, 64
        %v297 = vpop.permute.xlu0 %296
        %300 = vst.msk [vmem:[#allocation3 + $0x8] sm:$0xff] %vm275, %v295
        %301 = vst.msk [vmem:[#allocation3 + $0x30] sm:$0xff] %vm275, %v297
        %v302 = vld [vmem:[#allocation2 + $0x1] sm:$0xff]
        %v303 = vld [vmem:[#allocation2 + $0x9] sm:$0xff]
        %306 = vrot.lane.b32.xlu0 %v302, 124
        %v307 = vpop.permute.xlu0 %306
        %308 = vrot.lane.b32.xlu0 %v303, 124
        %v309 = vpop.permute.xlu0 %308
        %312 = vst.msk [vmem:[#allocation3 + $0x10] sm:$0xff] %vm262, %v307
        %313 = vst.msk [vmem:[#allocation3 + $0x38] sm:$0xff] %vm262, %v309
        %v314 = vld [vmem:[#allocation2 + $0x1] sm:$0xff]
        %v315 = vld [vmem:[#allocation2 + $0x9] sm:$0xff]
        %318 = vrot.lane.b32.xlu0 %v314, 56
        %v319 = vpop.permute.xlu0 %318
        %320 = vrot.lane.b32.xlu0 %v315, 56
        %v321 = vpop.permute.xlu0 %320
        %324 = vst.msk [vmem:[#allocation3 + $0x10] sm:$0xff] %vm275, %v319
        %325 = vst.msk [vmem:[#allocation3 + $0x38] sm:$0xff] %vm275, %v321
        %v326 = vld [vmem:[#allocation2 + $0x2] sm:$0xff]
        %v327 = vld [vmem:[#allocation2 + $0xa] sm:$0xff]
        %328 = vst.msk [vmem:[#allocation3 + $0x18] sm:$0xff] %vm262, %v326
        %329 = vst.msk [vmem:[#allocation3 + $0x40] sm:$0xff] %vm262, %v327
        %v330 = vld [vmem:[#allocation2 + $0x2] sm:$0xff]
        %v331 = vld [vmem:[#allocation2 + $0xa] sm:$0xff]
        %334 = vrot.lane.b32.xlu0 %v330, 60
        %v335 = vpop.permute.xlu0 %334
        %336 = vrot.lane.b32.xlu0 %v331, 60
        %v337 = vpop.permute.xlu0 %336
        %340 = vst.msk [vmem:[#allocation3 + $0x18] sm:$0xff] %vm275, %v335
        %341 = vst.msk [vmem:[#allocation3 + $0x40] sm:$0xff] %vm275, %v337
        %v342 = vld [vmem:[#allocation2 + $0x2] sm:$0xff]
        %v343 = vld [vmem:[#allocation2 + $0xa] sm:$0xff]
        %346 = vrot.lane.b32.xlu0 %v342, 120
        %v347 = vpop.permute.xlu0 %346
        %348 = vrot.lane.b32.xlu0 %v343, 120
        %v349 = vpop.permute.xlu0 %348
        %352 = vst.msk [vmem:[#allocation3 + $0x20] sm:$0xff] %vm262, %v347
        %353 = vst.msk [vmem:[#allocation3 + $0x48] sm:$0xff] %vm262, %v349
        %v354 = vld [vmem:[#allocation3] sm:$0xff]
        %v355 = vld [vmem:[#allocation3 + $0x8] sm:$0xff]
        %v356 = vld [vmem:[#allocation3 + $0x10] sm:$0xff]
        %v357 = vld [vmem:[#allocation3 + $0x18] sm:$0xff]
        %v358 = vld [vmem:[#allocation3 + $0x20] sm:$0xff]
        %v359 = vld [vmem:[#allocation3 + $0x28] sm:$0xff]
        %v360 = vld [vmem:[#allocation3 + $0x30] sm:$0xff]
        %v361 = vld [vmem:[#allocation3 + $0x38] sm:$0xff]
        %v362 = vld [vmem:[#allocation3 + $0x40] sm:$0xff]
        %v363 = vld [vmem:[#allocation3 + $0x48] sm:$0xff]
        %v364 = vld [vmem:[#allocation7] sm:$0xff]
        %v365 = vld [vmem:[#allocation7 + $0x8] sm:$0xff]
        %v366 = vld [vmem:[#allocation7 + $0x10] sm:$0xff]
        %v367 = vld [vmem:[#allocation7 + $0x18] sm:$0xff]
        %v368 = vld [vmem:[#allocation7 + $0x20] sm:$0xff]
        %v369 = vld [vmem:[#allocation7 + $0x28] sm:$0xff]
        %v370 = vld [vmem:[#allocation7 + $0x30] sm:$0xff]
        %v371 = vld [vmem:[#allocation7 + $0x38] sm:$0xff]
        %v372 = vld [vmem:[#allocation7 + $0x40] sm:$0xff]
        %v373 = vld [vmem:[#allocation7 + $0x48] sm:$0xff]
        %v374 = vld [vmem:[#allocation7 + $0x50] sm:$0xff]
        %v375 = vld [vmem:[#allocation7 + $0x58] sm:$0xff]
        %v376 = vld [vmem:[#allocation7 + $0x60] sm:$0xff]
        %v377 = vld [vmem:[#allocation7 + $0x68] sm:$0xff]
        %v378 = vld [vmem:[#allocation7 + $0x70] sm:$0xff]
        %v379 = vld [vmem:[#allocation7 + $0x78] sm:$0xff]
        %v380 = vld [vmem:[#allocation7 + $0x80] sm:$0xff]
        %v381 = vld [vmem:[#allocation7 + $0x88] sm:$0xff]
        %v382 = vld [vmem:[#allocation7 + $0x90] sm:$0xff]
        %v383 = vld [vmem:[#allocation7 + $0x98] sm:$0xff]
        %v384 = vld [vmem:[#allocation7 + $0xa0] sm:$0xff]
        %v385 = vld [vmem:[#allocation7 + $0xa8] sm:$0xff]
        %v386 = vld [vmem:[#allocation7 + $0xb0] sm:$0xff]
        %v387 = vld [vmem:[#allocation7 + $0xb8] sm:$0xff]
        %v388 = vld [vmem:[#allocation7 + $0xc0] sm:$0xff]
        %v389 = vld [vmem:[#allocation7 + $0xc8] sm:$0xff]
        %v390 = vld [vmem:[#allocation7 + $0xd0] sm:$0xff]
        %v391 = vld [vmem:[#allocation7 + $0xd8] sm:$0xff]
        %v392 = vld [vmem:[#allocation7 + $0xe0] sm:$0xff]
        %v393 = vld [vmem:[#allocation7 + $0xe8] sm:$0xff]
        %v394 = vld [vmem:[#allocation7 + $0xf0] sm:$0xff]
        %v395 = vld [vmem:[#allocation7 + $0xf8] sm:$0xff]
        %v396 = vld [vmem:[#allocation7 + $0x100] sm:$0xff]
        %v397 = vld [vmem:[#allocation7 + $0x108] sm:$0xff]
        %v398 = vld [vmem:[#allocation7 + $0x110] sm:$0xff]
        %v399 = vld [vmem:[#allocation7 + $0x118] sm:$0xff]
        %v400 = vld [vmem:[#allocation7 + $0x120] sm:$0xff]
        %v401 = vld [vmem:[#allocation7 + $0x128] sm:$0xff]
        %v402 = vld [vmem:[#allocation7 + $0x130] sm:$0xff]
        %v403 = vld [vmem:[#allocation7 + $0x138] sm:$0xff]
        %v404 = vld [vmem:[#allocation7 + $0x140] sm:$0xff]
        %v405 = vld [vmem:[#allocation7 + $0x148] sm:$0xff]
        %v406 = vld [vmem:[#allocation7 + $0x150] sm:$0xff]
        %v407 = vld [vmem:[#allocation7 + $0x158] sm:$0xff]
        %v408 = vld [vmem:[#allocation7 + $0x160] sm:$0xff]
        %v409 = vld [vmem:[#allocation7 + $0x168] sm:$0xff]
        %v410 = vld [vmem:[#allocation7 + $0x170] sm:$0xff]
        %v411 = vld [vmem:[#allocation7 + $0x178] sm:$0xff]
        %v412 = vld [vmem:[#allocation7 + $0x180] sm:$0xff]
        %v413 = vld [vmem:[#allocation7 + $0x188] sm:$0xff]
        %v414 = vld [vmem:[#allocation7 + $0x190] sm:$0xff]
        %v415 = vld [vmem:[#allocation7 + $0x198] sm:$0xff]
        %v416 = vld [vmem:[#allocation7 + $0x1a0] sm:$0xff]
        %v417 = vld [vmem:[#allocation7 + $0x1a8] sm:$0xff]
        %v418 = vld [vmem:[#allocation7 + $0x1b0] sm:$0xff]
        %v419 = vld [vmem:[#allocation7 + $0x1b8] sm:$0xff]
        %v420 = vld [vmem:[#allocation7 + $0x1c0] sm:$0xff]
        %v421 = vld [vmem:[#allocation7 + $0x1c8] sm:$0xff]
        %v422 = vld [vmem:[#allocation7 + $0x1d0] sm:$0xff]
        %v423 = vld [vmem:[#allocation7 + $0x1d8] sm:$0xff]
        %v424 = vld [vmem:[#allocation7 + $0x1e0] sm:$0xff]
        %v425 = vld [vmem:[#allocation7 + $0x1e8] sm:$0xff]
        %v426 = vld [vmem:[#allocation7 + $0x1f0] sm:$0xff]
        %v427 = vld [vmem:[#allocation7 + $0x1f8] sm:$0xff]
        %v428 = vld [vmem:[#allocation7 + $0x200] sm:$0xff]
        %v429 = vld [vmem:[#allocation7 + $0x208] sm:$0xff]
        %v430 = vld [vmem:[#allocation7 + $0x210] sm:$0xff]
        %v431 = vld [vmem:[#allocation7 + $0x218] sm:$0xff]
        %v432 = vld [vmem:[#allocation7 + $0x220] sm:$0xff]
        %v433 = vld [vmem:[#allocation7 + $0x228] sm:$0xff]
        %v434 = vld [vmem:[#allocation7 + $0x230] sm:$0xff]
        %v435 = vld [vmem:[#allocation7 + $0x238] sm:$0xff]
        %v436 = vld [vmem:[%s2] sm:$0x1]
        %v438 = vlaneseq
        %v439 = vshrl.u32 %v438, 7
        %v440 = vsub.s32 0, %v439
        %v441 = vrot.slane %v436, %v440
        %v444 = vsel %vm262, %v358, 0
        %v447 = vsel %vm262, %v363, 0
        %449 = vmatprep.subr.mxu0 0.0
        %450 = vmatpush1.msra.mxu0 %v379
        %451 = vmatprep.subr.mxu0 0.0
        %452 = vmatpush1.msra.mxu0 %v378
        %453 = vmatprep.subr.mxu0 0.0
        %454 = vmatpush1.msra.mxu0 %v377
        %455 = vmatprep.subr.mxu0 0.0
        %456 = vmatpush1.msra.mxu0 %v376
        %457 = vmatprep.subr.mxu0 0.0
        %458 = vmatpush1.msra.mxu0 %v375
        %459 = vmatprep.subr.mxu0 0.0
        %460 = vmatpush1.msra.mxu0 %v374
        %461 = vmatprep.subr.mxu0 0.0
        %462 = vmatpush1.msra.mxu0 %v373
        %463 = vmatprep.subr.mxu0 0.0
        %464 = vmatpush1.msra.mxu0 %v372
        %465 = vmatprep.subr.mxu0 0.0
        %466 = vmatpush1.msra.mxu0 %v371
        %467 = vmatprep.subr.mxu0 0.0
        %468 = vmatpush1.msra.mxu0 %v370
        %469 = vmatprep.subr.mxu0 0.0
        %470 = vmatpush1.msra.mxu0 %v369
        %471 = vmatprep.subr.mxu0 0.0
        %472 = vmatpush1.msra.mxu0 %v368
        %473 = vmatprep.subr.mxu0 0.0
        %474 = vmatpush1.msra.mxu0 %v367
        %475 = vmatprep.subr.mxu0 0.0
        %476 = vmatpush1.msra.mxu0 %v366
        %477 = vmatprep.subr.mxu0 0.0
        %478 = vmatpush1.msra.mxu0 %v365
        %479 = vmatprep.subr.mxu0 0.0
        %480 = vmatpush1.msra.mxu0 %v364
        %481 = vmatprep.subr.mxu0 0.0
        %482 = vmatpush2.msra.mxu0 %v395
        %483 = vmatprep.subr.mxu0 0.0
        %484 = vmatpush2.msra.mxu0 %v394
        %485 = vmatprep.subr.mxu0 0.0
        %486 = vmatpush2.msra.mxu0 %v393
        %487 = vmatprep.subr.mxu0 0.0
        %488 = vmatpush2.msra.mxu0 %v392
        %489 = vmatprep.subr.mxu0 0.0
        %490 = vmatpush2.msra.mxu0 %v391
        %491 = vmatprep.subr.mxu0 0.0
        %492 = vmatpush2.msra.mxu0 %v390
        %493 = vmatprep.subr.mxu0 0.0
        %494 = vmatpush2.msra.mxu0 %v389
        %495 = vmatprep.subr.mxu0 0.0
        %496 = vmatpush2.msra.mxu0 %v388
        %497 = vmatprep.subr.mxu0 0.0
        %498 = vmatpush2.msra.mxu0 %v387
        %499 = vmatprep.subr.mxu0 0.0
        %500 = vmatpush2.msra.mxu0 %v386
        %501 = vmatprep.subr.mxu0 0.0
        %502 = vmatpush2.msra.mxu0 %v385
        %503 = vmatprep.subr.mxu0 0.0
        %504 = vmatpush2.msra.mxu0 %v384
        %505 = vmatprep.subr.mxu0 0.0
        %506 = vmatpush2.msra.mxu0 %v383
        %507 = vmatprep.subr.mxu0 0.0
        %508 = vmatpush2.msra.mxu0 %v382
        %509 = vmatprep.subr.mxu0 0.0
        %510 = vmatpush2.msra.mxu0 %v381
        %511 = vmatprep.subr.mxu0 0.0
        %512 = vmatpush2.msra.mxu0 %v380
        %513 = vmatprep.mubr.f32.mxu0 %v355
        %514 = vmatmul.mubr.f32.gmra.mxu0 %v354
        %v515 = vpop.f32.mrf.mxu0
        %v516 = vadd.f32 %v441, %v515
        %v517 = vpop.f32.mrf.mxu0
        %518 = vmatprep.mubr.f32.mxu0 %v360
        %519 = vmatmul.mubr.f32.gmra.mxu0 %v359
        %v520 = vpop.f32.mrf.mxu0
        %v521 = vadd.f32 %v441, %v520
        %v522 = vpop.f32.mrf.mxu0
        %523 = vdwg.mxu0
        %524 = vmatprep.subr.mxu0 0.0
        %525 = vmatpush1.msra.mxu0 %v411
        %526 = vmatprep.subr.mxu0 0.0
        %527 = vmatpush1.msra.mxu0 %v410
        %528 = vmatprep.subr.mxu0 0.0
        %529 = vmatpush1.msra.mxu0 %v409
        %530 = vmatprep.subr.mxu0 0.0
        %531 = vmatpush1.msra.mxu0 %v408
        %532 = vmatprep.subr.mxu0 0.0
        %533 = vmatpush1.msra.mxu0 %v407
        %534 = vmatprep.subr.mxu0 0.0
        %535 = vmatpush1.msra.mxu0 %v406
        %536 = vmatprep.subr.mxu0 0.0
        %537 = vmatpush1.msra.mxu0 %v405
        %538 = vmatprep.subr.mxu0 0.0
        %539 = vmatpush1.msra.mxu0 %v404
        %540 = vmatprep.subr.mxu0 0.0
        %541 = vmatpush1.msra.mxu0 %v403
        %542 = vmatprep.subr.mxu0 0.0
        %543 = vmatpush1.msra.mxu0 %v402
        %544 = vmatprep.subr.mxu0 0.0
        %545 = vmatpush1.msra.mxu0 %v401
        %546 = vmatprep.subr.mxu0 0.0
        %547 = vmatpush1.msra.mxu0 %v400
        %548 = vmatprep.subr.mxu0 0.0
        %549 = vmatpush1.msra.mxu0 %v399
        %550 = vmatprep.subr.mxu0 0.0
        %551 = vmatpush1.msra.mxu0 %v398
        %552 = vmatprep.subr.mxu0 0.0
        %553 = vmatpush1.msra.mxu0 %v397
        %554 = vmatprep.subr.mxu0 0.0
        %555 = vmatpush1.msra.mxu0 %v396
        %556 = vmatprep.subr.mxu0 0.0
        %557 = vmatpush2.msra.mxu0 %v427
        %558 = vmatprep.subr.mxu0 0.0
        %559 = vmatpush2.msra.mxu0 %v426
        %560 = vmatprep.subr.mxu0 0.0
        %561 = vmatpush2.msra.mxu0 %v425
        %562 = vmatprep.subr.mxu0 0.0
        %563 = vmatpush2.msra.mxu0 %v424
        %564 = vmatprep.subr.mxu0 0.0
        %565 = vmatpush2.msra.mxu0 %v423
        %566 = vmatprep.subr.mxu0 0.0
        %567 = vmatpush2.msra.mxu0 %v422
        %568 = vmatprep.subr.mxu0 0.0
        %569 = vmatpush2.msra.mxu0 %v421
        %570 = vmatprep.subr.mxu0 0.0
        %571 = vmatpush2.msra.mxu0 %v420
        %572 = vmatprep.subr.mxu0 0.0
        %573 = vmatpush2.msra.mxu0 %v419
        %574 = vmatprep.subr.mxu0 0.0
        %575 = vmatpush2.msra.mxu0 %v418
        %576 = vmatprep.subr.mxu0 0.0
        %577 = vmatpush2.msra.mxu0 %v417
        %578 = vmatprep.subr.mxu0 0.0
        %579 = vmatpush2.msra.mxu0 %v416
        %580 = vmatprep.subr.mxu0 0.0
        %581 = vmatpush2.msra.mxu0 %v415
        %582 = vmatprep.subr.mxu0 0.0
        %583 = vmatpush2.msra.mxu0 %v414
        %584 = vmatprep.subr.mxu0 0.0
        %585 = vmatpush2.msra.mxu0 %v413
        %586 = vmatprep.subr.mxu0 0.0
        %587 = vmatpush2.msra.mxu0 %v412
        %588 = vmatprep.mubr.f32.mxu0 %v357
        %589 = vmatmul.mubr.f32.gmra.mxu0 %v356
        %v590 = vpop.f32.mrf.mxu0
        %v591 = vadd.f32 %v516, %v590
        %v592 = vpop.f32.mrf.mxu0
        %593 = vmatprep.mubr.f32.mxu0 %v362
        %594 = vmatmul.mubr.f32.gmra.mxu0 %v361
        %v595 = vpop.f32.mrf.mxu0
        %v596 = vadd.f32 %v521, %v595
        %v597 = vpop.f32.mrf.mxu0
        %598 = vdwg.mxu0
        %599 = vmatprep.subr.mxu0 0.0
        %600 = vmatpush1.msra.mxu0 0.0
        %601 = vmatprep.subr.mxu0 0.0
        %602 = vmatpush1.msra.mxu0 0.0
        %603 = vmatprep.subr.mxu0 0.0
        %604 = vmatpush1.msra.mxu0 0.0
        %605 = vmatprep.subr.mxu0 0.0
        %606 = vmatpush1.msra.mxu0 0.0
        %607 = vmatprep.subr.mxu0 0.0
        %608 = vmatpush1.msra.mxu0 0.0
        %609 = vmatprep.subr.mxu0 0.0
        %610 = vmatpush1.msra.mxu0 0.0
        %611 = vmatprep.subr.mxu0 0.0
        %612 = vmatpush1.msra.mxu0 0.0
        %613 = vmatprep.subr.mxu0 0.0
        %614 = vmatpush1.msra.mxu0 0.0
        %615 = vmatprep.subr.mxu0 0.0
        %616 = vmatpush1.msra.mxu0 %v435
        %617 = vmatprep.subr.mxu0 0.0
        %618 = vmatpush1.msra.mxu0 %v434
        %619 = vmatprep.subr.mxu0 0.0
        %620 = vmatpush1.msra.mxu0 %v433
        %621 = vmatprep.subr.mxu0 0.0
        %622 = vmatpush1.msra.mxu0 %v432
        %623 = vmatprep.subr.mxu0 0.0
        %624 = vmatpush1.msra.mxu0 %v431
        %625 = vmatprep.subr.mxu0 0.0
        %626 = vmatpush1.msra.mxu0 %v430
        %627 = vmatprep.subr.mxu0 0.0
        %628 = vmatpush1.msra.mxu0 %v429
        %629 = vmatprep.subr.mxu0 0.0
        %630 = vmatpush1.msra.mxu0 %v428
        %631 = vmatprep.subr.mxu0 0.0
        %632 = vmatpush2.msra.mxu0 0.0
        %633 = vmatprep.subr.mxu0 0.0
        %634 = vmatpush2.msra.mxu0 0.0
        %635 = vmatprep.subr.mxu0 0.0
        %636 = vmatpush2.msra.mxu0 0.0
        %637 = vmatprep.subr.mxu0 0.0
        %638 = vmatpush2.msra.mxu0 0.0
        %639 = vmatprep.subr.mxu0 0.0
        %640 = vmatpush2.msra.mxu0 0.0
        %641 = vmatprep.subr.mxu0 0.0
        %642 = vmatpush2.msra.mxu0 0.0
        %643 = vmatprep.subr.mxu0 0.0
        %644 = vmatpush2.msra.mxu0 0.0
        %645 = vmatprep.subr.mxu0 0.0
        %646 = vmatpush2.msra.mxu0 0.0
        %647 = vmatprep.subr.mxu0 0.0
        %648 = vmatpush2.msra.mxu0 0.0
        %649 = vmatprep.subr.mxu0 0.0
        %650 = vmatpush2.msra.mxu0 0.0
        %651 = vmatprep.subr.mxu0 0.0
        %652 = vmatpush2.msra.mxu0 0.0
        %653 = vmatprep.subr.mxu0 0.0
        %654 = vmatpush2.msra.mxu0 0.0
        %655 = vmatprep.subr.mxu0 0.0
        %656 = vmatpush2.msra.mxu0 0.0
        %657 = vmatprep.subr.mxu0 0.0
        %658 = vmatpush2.msra.mxu0 0.0
        %659 = vmatprep.subr.mxu0 0.0
        %660 = vmatpush2.msra.mxu0 0.0
        %661 = vmatprep.subr.mxu0 0.0
        %662 = vmatpush2.msra.mxu0 0.0
        %663 = vmatprep.mubr.f32.mxu0 0.0
        %664 = vmatmul.mubr.f32.gmra.mxu0 %v444
        %v665 = vpop.f32.mrf.mxu0
        %v666 = vadd.f32 %v591, %v665
        %v667 = vpop.f32.mrf.mxu0
        %668 = vmatprep.mubr.f32.mxu0 0.0
        %669 = vmatmul.mubr.f32.gmra.mxu0 %v447
        %v670 = vpop.f32.mrf.mxu0
        %v671 = vadd.f32 %v596, %v670
        %v672 = vpop.f32.mrf.mxu0
        %673 = vdwg.mxu0
        %v674 = vmax.f32 %v666, 0.0
        %v675 = vmax.f32 %v671, 0.0
        %v676 = vadd.f32 %v674, %v675
        %v677 = vrot.slane %v676, 4
        %v678 = vadd.f32 %v676, %v677
        %v679 = vrot.slane %v678, 2
        %v680 = vadd.f32 %v678, %v679
        %v681 = vrot.slane %v680, 1
        %v682 = vadd.f32 %v680, %v681
        %683 = vst [vmem:[%s241] sm:$0x1] %v682
        %v684 = vmul.f32 %v674, %v674
        %v685 = vmul.f32 %v675, %v675
        %v686 = vadd.f32 %v684, %v685
        %v687 = vrot.slane %v686, 4
        %v688 = vadd.f32 %v686, %v687
        %v689 = vrot.slane %v688, 2
        %v690 = vadd.f32 %v688, %v689
        %v691 = vrot.slane %v690, 1
        %v692 = vadd.f32 %v690, %v691
        %693 = vst [vmem:[%s241 + $0x1] sm:$0x1] %v692
        %694 = vst [vmem:[%s234] sm:$0xff] %v674
        %695 = vst [vmem:[%s234 + $0x8] sm:$0xff] %v675
        %s696 = sand.u32 %s102, 1
        %s697 = scalar_lea.sflag [#allocation6], %s696
        %s698 = sand.u32 %s102, 1
        %s699 = smul.addr %s698, 16
        %s700 = scalar_lea.vmem [#allocation9], %s699
        %s701 = sand.u32 %s128, 1
        %s702 = scalar_lea.sflag [#allocation11], %s701
        %s703 = sand.u32 %s128, 1
        %s704 = smul.addr %s703, 2
        %s705 = scalar_lea.vmem [#allocation10], %s704
        // Predicated region
        $region41: #{tpu_custom_call.1} parent=31 // pred_check
          %p706 = pneg %p112
        $region42: #{tpu_custom_call.1} parent=31 // pred_check_branch
          %708 = sbr.rel (%p706) target = $region44
        $region43: #{tpu_custom_call.1} parent=31 // pred_region
          %s710 = ssub.s32 256, 256
          %711 = vsyncadd %s697, %s710
          %s712 = smul.addr %s26, 2
          %s713 = smul.addr %s712, 128
          %s714 = scalar_lea.hbm %s3, %s713
          %s715 = sshll.u32 %s700, 4
          %s716 = int_to_ptr.vmem [resolvable:$true] %s715
          %721 = dma.vmem_to_hbm [thread:$0]  %s716, 256, %s714, %s697, 128, 128, 8
        $region44: #{tpu_custom_call.1} parent=31 // pred_fallthru
          _
        // Predicated region
        $region45: #{tpu_custom_call.1} parent=31 // pred_check
          %p722 = pneg %p138
        $region46: #{tpu_custom_call.1} parent=31 // pred_check_branch
          %724 = sbr.rel (%p722) target = $region48
        $region47: #{tpu_custom_call.1} parent=31 // pred_region
          %s726 = ssub.s32 32, 32
          %727 = vsyncadd %s702, %s726
          %s728 = smul.addr %s26, 32
          %s729 = scalar_lea.hbm %s4, %s728
          %s731 = sshll.u32 %s705, 4
          %s732 = int_to_ptr.vmem [resolvable:$true] %s731
          %734 = dma.vmem_to_hbm [thread:$0]  %s732, 32, %s729, %s702
        $region48: #{tpu_custom_call.1} parent=31 // pred_fallthru
          _
      $region32: #{tpu_custom_call.1} parent=5 // pred_fallthru
        _
      %p735 = scmp.le.s32.totalorder 2, %s21
      // Predicated region
      $region49: #{tpu_custom_call.1} parent=5 // pred_check
        %p736 = pneg %p735
      $region50: #{tpu_custom_call.1} parent=5 // pred_check_branch
        %738 = sbr.rel (%p736) target = $region52
      $region51: #{tpu_custom_call.1} parent=5 // pred_region
        %s739 = ssub.s32 %s21, 2
        // Predicated region
        $region53: #{tpu_custom_call.1} parent=51 // pred_check
          %p740 = pneg %p118
        $region54: #{tpu_custom_call.1} parent=51 // pred_check_branch
          %742 = sbr.rel (%p740) target = $region56
        $region55: #{tpu_custom_call.1} parent=51 // pred_region
          %s743 = sand.u32 %s103, 1
          %s744 = scalar_lea.sflag [#allocation6], %s743
          %s745 = sand.u32 %s103, 1
          %s746 = smul.addr %s745, 16
          %s747 = scalar_lea.vmem [#allocation9], %s746
          %748 = dma.done %s744, 256
        $region56: #{tpu_custom_call.1} parent=51 // pred_fallthru
          _
        // Predicated region
        $region57: #{tpu_custom_call.1} parent=51 // pred_check
          %p749 = pneg %p144
        $region58: #{tpu_custom_call.1} parent=51 // pred_check_branch
          %751 = sbr.rel (%p749) target = $region60
        $region59: #{tpu_custom_call.1} parent=51 // pred_region
          %s752 = sand.u32 %s129, 1
          %s753 = scalar_lea.sflag [#allocation11], %s752
          %s754 = sand.u32 %s129, 1
          %s755 = smul.addr %s754, 2
          %s756 = scalar_lea.vmem [#allocation10], %s755
          %757 = dma.done %s753, 32
        $region60: #{tpu_custom_call.1} parent=51 // pred_fallthru
          _
      $region52: #{tpu_custom_call.1} parent=5 // pred_fallthru
        _
    $region6: #{tpu_custom_call.1} parent=1 // loop_footer
      %s25 = sadd.s32 1, %s21
    $region7: #{tpu_custom_call.1} parent=1 // loop_footer_branch
      %20 = sbr.rel target = $region3
    $region8: #{tpu_custom_call.1} parent=1 // loop_exit
      _
    %758 = vsyncpa [#allocation5], 1
    %s759 = scalar_lea.sflag [#allocation5], 1
    %760 = vsyncpa %s759, 1
    %761 = vsyncpa [#allocation8], 1
    %762 = vsyncpa [#allocation6], 1
    %s763 = scalar_lea.sflag [#allocation6], 1
    %764 = vsyncpa %s763, 1
    %765 = vsyncpa [#allocation11], 1
    %s766 = scalar_lea.sflag [#allocation11], 1
    %767 = vsyncpa %s766, 1

</llo_original>
